<compile_context>
chip_gen: v5e
topology: v5e:2x2
jax: 0.10.0
libtpu: 0.0.40
codegen_flags: <defaults>
</compile_context>

<pallas_src>
import jax
import jax.numpy as jnp
from jax.experimental import pallas as pl
from jax.experimental.pallas import tpu as pltpu

LATENT_DIM = 64
MAX_TILE_B = 128  # max batch rows per grid step (full MXU row occupancy)


def vae_kernel(x_ref, eps_ref,
               w1_ref, b1_ref, w2_ref, b2_ref, w3_ref, b3_ref,
               w4_ref, b4_ref, w5_ref, b5_ref, w6_ref, b6_ref,
               recon_ref, zparams_ref):
    bf16 = jnp.bfloat16
    f32 = jnp.float32

    x = x_ref[...]

    # ----- encoder: input_dim -> 256 -> 128 -> 2*latent -----
    h = jnp.dot(x.astype(bf16), w1_ref[...], preferred_element_type=f32) + b1_ref[...]
    h = jnp.maximum(h, 0.0)                                            # ReLU (f32 VPU)
    h = jnp.dot(h.astype(bf16), w2_ref[...], preferred_element_type=f32) + b2_ref[...]
    h = jnp.maximum(h, 0.0)                                            # ReLU
    z_params = jnp.dot(h.astype(bf16), w3_ref[...], preferred_element_type=f32) + b3_ref[...]

    # Lane-dense (tile_b, 128) store; mu / log_var split happens outside the kernel.
    zparams_ref[...] = z_params

    # ----- reparameterize: z = mu + eps * exp(0.5 * log_var), no sub-128-lane slices -----
    # lanes [0, 64) of z_params hold mu, lanes [64, 128) hold log_var.
    lane = jax.lax.broadcasted_iota(jnp.int32, z_params.shape, dimension=1)
    is_mu = lane < LATENT_DIM
    mu_lanes = jnp.where(is_mu, z_params, 0.0)
    # Circular lane roll by 64 over the 128-wide axis brings log_var into lanes [0, 64).
    logvar_lanes = pltpu.roll(z_params, shift=LATENT_DIM, axis=1)
    std_lanes = jnp.where(is_mu, jnp.exp(0.5 * logvar_lanes), 0.0)     # exact 0 in upper lanes
    # eps_ref is (tile_b, 128) with zeros in lanes [64, 128); z_pad is exactly zero there,
    # so feeding the K=128 zero-padded w4 reproduces the original K=64 matmul.
    z_pad = mu_lanes + eps_ref[...] * std_lanes

    # ----- decoder: latent (padded to 128) -> 128 -> 256 -> input_dim -----
    d = jnp.dot(z_pad.astype(bf16), w4_ref[...], preferred_element_type=f32) + b4_ref[...]
    d = jnp.maximum(d, 0.0)                                            # ReLU
    d = jnp.dot(d.astype(bf16), w5_ref[...], preferred_element_type=f32) + b5_ref[...]
    d = jnp.maximum(d, 0.0)                                            # ReLU
    logits = jnp.dot(d.astype(bf16), w6_ref[...], preferred_element_type=f32) + b6_ref[...]

    recon_ref[...] = jax.nn.sigmoid(logits)                            # Sigmoid (f32 EUP)


def vae_forward(x, eps, prepared_params):
    """x: (B, input_dim) f32, eps: (B, LATENT_DIM) f32, prepared_params from prepare_params."""
    B, input_dim = x.shape
    (w1, b1, w2, b2, w3, b3, w4, b4, w5, b5, w6, b6) = prepared_params
    param_list = [w1, b1, w2, b2, w3, b3, w4, b4, w5, b5, w6, b6]

    # Adaptive batch tile: sublane-aligned, never larger than needed, capped at 128.
    tile_b = min(MAX_TILE_B, ((B + 7) // 8) * 8)
    n_tiles = pl.cdiv(B, tile_b)
    B_pad = n_tiles * tile_b
    if B_pad != B:
        x = jnp.pad(x, ((0, B_pad - B), (0, 0)))
        eps = jnp.pad(eps, ((0, B_pad - B), (0, 0)))
    # Pad eps to 128 lanes with exact zeros in lanes [64, 128) (lane-dense input,
    # and guarantees the padded half of z is exactly zero).
    eps_pad = jnp.pad(eps.astype(jnp.float32),
                      ((0, 0), (0, 2 * LATENT_DIM - eps.shape[1])))

    def batch_spec(cols):
        return pl.BlockSpec((tile_b, cols), lambda i: (i, 0))

    def resident_spec(arr):
        zeros = (0,) * arr.ndim
        return pl.BlockSpec(arr.shape, lambda i: zeros)   # same block every step -> stays in VMEM

    in_specs = ([batch_spec(input_dim), batch_spec(2 * LATENT_DIM)]
                + [resident_spec(p) for p in param_list])
    out_specs = (batch_spec(input_dim), batch_spec(2 * LATENT_DIM))
    out_shape = (jax.ShapeDtypeStruct((B_pad, input_dim), jnp.float32),
                 jax.ShapeDtypeStruct((B_pad, 2 * LATENT_DIM), jnp.float32))

    # Advisory cost estimate so XLA schedules this small custom call sensibly.
    flops = int(2 * B_pad * (input_dim * 256 + 256 * 128 + 128 * 2 * LATENT_DIM
                             + 2 * LATENT_DIM * 128 + 128 * 256 + 256 * input_dim))
    transcendentals = int(B_pad * (2 * LATENT_DIM + input_dim))        # exp + sigmoid
    bytes_accessed = int(sum(int(p.size) * p.dtype.itemsize for p in param_list)
                         + int(x.size) * 4 + int(eps_pad.size) * 4
                         + B_pad * input_dim * 4 + B_pad * 2 * LATENT_DIM * 4)

    recon_pad, zparams_pad = pl.pallas_call(
        vae_kernel,
        out_shape=out_shape,
        grid=(n_tiles,),
        in_specs=in_specs,
        out_specs=out_specs,
        compiler_params=pltpu.CompilerParams(dimension_semantics=("parallel",)),
        cost_estimate=pl.CostEstimate(flops=flops,
                                      transcendentals=transcendentals,
                                      bytes_accessed=bytes_accessed),
    )(x, eps_pad, *param_list)

    recon = recon_pad[:B]
    z_params = zparams_pad[:B]
    mu = z_params[:, :LATENT_DIM]
    log_var = z_params[:, LATENT_DIM:]
    return recon, mu, log_var


def _linear_params(key, fan_in, fan_out):
    """Deterministic init mimicking nn.Linear: U(-1/sqrt(fan_in), 1/sqrt(fan_in))."""
    kw, kb = jax.random.split(key)
    bound = 1.0 / jnp.sqrt(float(fan_in))
    w = jax.random.uniform(kw, (fan_in, fan_out), jnp.float32, -bound, bound)
    b = jax.random.uniform(kb, (1, fan_out), jnp.float32, -bound, bound)
    return w, b


def make_params(key, input_dim, latent_dim):
    keys = jax.random.split(key, 6)
    # encoder: input_dim -> 256 -> 128 -> 2*latent_dim
    w1, b1 = _linear_params(keys[0], input_dim, 256)
    w2, b2 = _linear_params(keys[1], 256, 128)
    w3, b3 = _linear_params(keys[2], 128, latent_dim * 2)
    # decoder: latent_dim -> 128 -> 256 -> input_dim
    w4, b4 = _linear_params(keys[3], latent_dim, 128)
    w5, b5 = _linear_params(keys[4], 128, 256)
    w6, b6 = _linear_params(keys[5], 256, input_dim)
    return (w1, b1, w2, b2, w3, b3, w4, b4, w5, b5, w6, b6)


def prepare_params(params):
    """One-time prep: weights -> bf16 (halves weight DMA), zero-pad w4 to K=128."""
    (w1, b1, w2, b2, w3, b3, w4, b4, w5, b5, w6, b6) = params
    bf16 = jnp.bfloat16
    w4_pad = jnp.zeros((2 * LATENT_DIM, w4.shape[1]), jnp.float32).at[:LATENT_DIM].set(w4)
    return (w1.astype(bf16), b1, w2.astype(bf16), b2, w3.astype(bf16), b3,
            w4_pad.astype(bf16), b4, w5.astype(bf16), b5, w6.astype(bf16), b6)


if __name__ == "__main__":
    INPUT_DIM = 256
    BATCH = 8

    root = jax.random.PRNGKey(0)
    k_params, k_x, k_eps = jax.random.split(root, 3)

    params = make_params(k_params, INPUT_DIM, LATENT_DIM)
    prepared = prepare_params(params)

    x = jax.random.uniform(k_x, (BATCH, INPUT_DIM), jnp.float32)        # data in [0, 1)
    eps = jax.random.normal(k_eps, (BATCH, LATENT_DIM), jnp.float32)    # reparam noise

    recon, mu, log_var = vae_forward(x, eps, prepared)
    jax.block_until_ready((recon, mu, log_var))

    # Plain-JAX f32 reference of the same math (kernel uses bf16 matmuls -> loose tolerance).
    w1, b1, w2, b2, w3, b3, w4, b4, w5, b5, w6, b6 = params
    h = jnp.maximum(x @ w1 + b1, 0.0)
    h = jnp.maximum(h @ w2 + b2, 0.0)
    zp = h @ w3 + b3
    mu_ref, lv_ref = zp[:, :LATENT_DIM], zp[:, LATENT_DIM:]
    z = mu_ref + eps * jnp.exp(0.5 * lv_ref)
    d = jnp.maximum(z @ w4 + b4, 0.0)
    d = jnp.maximum(d @ w5 + b5, 0.0)
    recon_ref = jax.nn.sigmoid(d @ w6 + b6)

    assert recon.shape == (BATCH, INPUT_DIM)
    assert mu.shape == (BATCH, LATENT_DIM) and log_var.shape == (BATCH, LATENT_DIM)
    assert float(jnp.max(jnp.abs(recon - recon_ref))) < 5e-2, "recon mismatch"
    assert float(jnp.max(jnp.abs(mu - mu_ref))) < 5e-2, "mu mismatch"
    assert float(jnp.max(jnp.abs(log_var - lv_ref))) < 5e-2, "log_var mismatch"

    print("KERNEL_OK")
</pallas_src>

<mosaic_0001>
module attributes {stable_mosaic.version = 11 : i64} {
  func.func @vae_kernel(%arg0: i32, %arg1: memref<8x256xf32, #tpu.memory_space<vmem>>, %arg2: memref<8x128xf32, #tpu.memory_space<vmem>>, %arg3: memref<256x256xbf16, #tpu.memory_space<vmem>>, %arg4: memref<1x256xf32, #tpu.memory_space<vmem>>, %arg5: memref<256x128xbf16, #tpu.memory_space<vmem>>, %arg6: memref<1x128xf32, #tpu.memory_space<vmem>>, %arg7: memref<128x128xbf16, #tpu.memory_space<vmem>>, %arg8: memref<1x128xf32, #tpu.memory_space<vmem>>, %arg9: memref<128x128xbf16, #tpu.memory_space<vmem>>, %arg10: memref<1x128xf32, #tpu.memory_space<vmem>>, %arg11: memref<128x256xbf16, #tpu.memory_space<vmem>>, %arg12: memref<1x256xf32, #tpu.memory_space<vmem>>, %arg13: memref<256x256xbf16, #tpu.memory_space<vmem>>, %arg14: memref<1x256xf32, #tpu.memory_space<vmem>>, %arg15: memref<8x256xf32, #tpu.memory_space<vmem>>, %arg16: memref<8x128xf32, #tpu.memory_space<vmem>>) attributes {dimension_semantics = [#tpu.dimension_semantics<parallel>], iteration_bounds = array<i64: 1>, scalar_prefetch = 0 : i64, scratch_operands = 0 : i64, tpu.core_type = #tpu.core_type<tc>, window_params = [{transform_indices = @transform_0, window_bounds = array<i64: 8, 256>}, {transform_indices = @transform_1, window_bounds = array<i64: 8, 128>}, {pipeline_mode = #tpu.pipeline_mode<synchronous>, transform_indices = @transform_2, window_bounds = array<i64: 256, 256>}, {pipeline_mode = #tpu.pipeline_mode<synchronous>, transform_indices = @transform_3, window_bounds = array<i64: 1, 256>}, {pipeline_mode = #tpu.pipeline_mode<synchronous>, transform_indices = @transform_4, window_bounds = array<i64: 256, 128>}, {pipeline_mode = #tpu.pipeline_mode<synchronous>, transform_indices = @transform_5, window_bounds = array<i64: 1, 128>}, {pipeline_mode = #tpu.pipeline_mode<synchronous>, transform_indices = @transform_6, window_bounds = array<i64: 128, 128>}, {pipeline_mode = #tpu.pipeline_mode<synchronous>, transform_indices = @transform_7, window_bounds = array<i64: 1, 128>}, {pipeline_mode = #tpu.pipeline_mode<synchronous>, transform_indices = @transform_8, window_bounds = array<i64: 128, 128>}, {pipeline_mode = #tpu.pipeline_mode<synchronous>, transform_indices = @transform_9, window_bounds = array<i64: 1, 128>}, {pipeline_mode = #tpu.pipeline_mode<synchronous>, transform_indices = @transform_10, window_bounds = array<i64: 128, 256>}, {pipeline_mode = #tpu.pipeline_mode<synchronous>, transform_indices = @transform_11, window_bounds = array<i64: 1, 256>}, {pipeline_mode = #tpu.pipeline_mode<synchronous>, transform_indices = @transform_12, window_bounds = array<i64: 256, 256>}, {pipeline_mode = #tpu.pipeline_mode<synchronous>, transform_indices = @transform_13, window_bounds = array<i64: 1, 256>}, {transform_indices = @transform_14, window_bounds = array<i64: 8, 256>}, {transform_indices = @transform_15, window_bounds = array<i64: 8, 128>}]} {
    %c0 = arith.constant 0 : index
    %c0_0 = arith.constant 0 : index
    %0 = vector.load %arg1[%c0, %c0_0] : memref<8x256xf32, #tpu.memory_space<vmem>>, vector<8x256xf32>
    %1 = arith.truncf %0 : vector<8x256xf32> to vector<8x256xbf16>
    %c0_1 = arith.constant 0 : index
    %c0_2 = arith.constant 0 : index
    %2 = vector.load %arg3[%c0_1, %c0_2] : memref<256x256xbf16, #tpu.memory_space<vmem>>, vector<256x256xbf16>
    %cst = arith.constant dense<0.000000e+00> : vector<8x256xf32>
    %3 = tpu.matmul %1, %2, %cst {dimension_numbers = #tpu.dot_dimension_numbers<[1], [0], [0], [1], [0, 0, 1, 1], [], []>} : vector<8x256xbf16>, vector<256x256xbf16>, vector<8x256xf32> -> vector<8x256xf32>
    %c0_3 = arith.constant 0 : index
    %c0_4 = arith.constant 0 : index
    %4 = vector.load %arg4[%c0_3, %c0_4] : memref<1x256xf32, #tpu.memory_space<vmem>>, vector<1x256xf32>
    %5 = vector.broadcast %4 : vector<1x256xf32> to vector<8x256xf32>
    %6 = arith.addf %3, %5 : vector<8x256xf32>
    %cst_5 = arith.constant 0.000000e+00 : f32
    %7 = vector.broadcast %cst_5 : f32 to vector<8x256xf32>
    %8 = arith.maximumf %6, %7 : vector<8x256xf32>
    %9 = arith.truncf %8 : vector<8x256xf32> to vector<8x256xbf16>
    %c0_6 = arith.constant 0 : index
    %c0_7 = arith.constant 0 : index
    %10 = vector.load %arg5[%c0_6, %c0_7] : memref<256x128xbf16, #tpu.memory_space<vmem>>, vector<256x128xbf16>
    %cst_8 = arith.constant dense<0.000000e+00> : vector<8x128xf32>
    %11 = tpu.matmul %9, %10, %cst_8 {dimension_numbers = #tpu.dot_dimension_numbers<[1], [0], [0], [1], [0, 0, 1, 1], [], []>} : vector<8x256xbf16>, vector<256x128xbf16>, vector<8x128xf32> -> vector<8x128xf32>
    %c0_9 = arith.constant 0 : index
    %c0_10 = arith.constant 0 : index
    %12 = vector.load %arg6[%c0_9, %c0_10] : memref<1x128xf32, #tpu.memory_space<vmem>>, vector<1x128xf32>
    %13 = vector.broadcast %12 : vector<1x128xf32> to vector<8x128xf32>
    %14 = arith.addf %11, %13 : vector<8x128xf32>
    %cst_11 = arith.constant 0.000000e+00 : f32
    %15 = vector.broadcast %cst_11 : f32 to vector<8x128xf32>
    %16 = arith.maximumf %14, %15 : vector<8x128xf32>
    %17 = arith.truncf %16 : vector<8x128xf32> to vector<8x128xbf16>
    %c0_12 = arith.constant 0 : index
    %c0_13 = arith.constant 0 : index
    %18 = vector.load %arg7[%c0_12, %c0_13] : memref<128x128xbf16, #tpu.memory_space<vmem>>, vector<128x128xbf16>
    %cst_14 = arith.constant dense<0.000000e+00> : vector<8x128xf32>
    %19 = tpu.matmul %17, %18, %cst_14 {dimension_numbers = #tpu.dot_dimension_numbers<[1], [0], [0], [1], [0, 0, 1, 1], [], []>} : vector<8x128xbf16>, vector<128x128xbf16>, vector<8x128xf32> -> vector<8x128xf32>
    %c0_15 = arith.constant 0 : index
    %c0_16 = arith.constant 0 : index
    %20 = vector.load %arg8[%c0_15, %c0_16] : memref<1x128xf32, #tpu.memory_space<vmem>>, vector<1x128xf32>
    %21 = vector.broadcast %20 : vector<1x128xf32> to vector<8x128xf32>
    %22 = arith.addf %19, %21 : vector<8x128xf32>
    %c0_17 = arith.constant 0 : index
    %c0_18 = arith.constant 0 : index
    %23 = vector.load %arg16[%c0_17, %c0_18] : memref<8x128xf32, #tpu.memory_space<vmem>>, vector<8x128xf32>
    tpu.vector_store %arg16[%c0_17, %c0_18], %22 {strides = array<i32>} : memref<8x128xf32, #tpu.memory_space<vmem>>, vector<8x128xf32>,
    %24 = tpu.iota {dimensions = array<i32: 1>} : vector<8x128xi32>
    %c64_i32 = arith.constant 64 : i32
    %25 = vector.broadcast %c64_i32 : i32 to vector<8x128xi32>
    %26 = arith.cmpi slt, %24, %25 : vector<8x128xi32>
    %cst_19 = arith.constant 0.000000e+00 : f32
    %27 = vector.broadcast %cst_19 : f32 to vector<8x128xf32>
    %28 = arith.select %26, %22, %27 : vector<8x128xi1>, vector<8x128xf32>
    %c64_i32_20 = arith.constant 64 : i32
    %29 = tpu.dynamic_rotate %22 by %c64_i32_20 dim 1 : vector<8x128xf32>, i32 -> vector<8x128xf32>
    %cst_21 = arith.constant 5.000000e-01 : f32
    %30 = vector.broadcast %cst_21 : f32 to vector<8x128xf32>
    %31 = arith.mulf %30, %29 : vector<8x128xf32>
    %32 = math.exp %31 : vector<8x128xf32>
    %cst_22 = arith.constant 0.000000e+00 : f32
    %33 = vector.broadcast %cst_22 : f32 to vector<8x128xf32>
    %34 = arith.select %26, %32, %33 : vector<8x128xi1>, vector<8x128xf32>
    %c0_23 = arith.constant 0 : index
    %c0_24 = arith.constant 0 : index
    %35 = vector.load %arg2[%c0_23, %c0_24] : memref<8x128xf32, #tpu.memory_space<vmem>>, vector<8x128xf32>
    %36 = arith.mulf %35, %34 : vector<8x128xf32>
    %37 = arith.addf %28, %36 : vector<8x128xf32>
    %38 = arith.truncf %37 : vector<8x128xf32> to vector<8x128xbf16>
    %c0_25 = arith.constant 0 : index
    %c0_26 = arith.constant 0 : index
    %39 = vector.load %arg9[%c0_25, %c0_26] : memref<128x128xbf16, #tpu.memory_space<vmem>>, vector<128x128xbf16>
    %cst_27 = arith.constant dense<0.000000e+00> : vector<8x128xf32>
    %40 = tpu.matmul %38, %39, %cst_27 {dimension_numbers = #tpu.dot_dimension_numbers<[1], [0], [0], [1], [0, 0, 1, 1], [], []>} : vector<8x128xbf16>, vector<128x128xbf16>, vector<8x128xf32> -> vector<8x128xf32>
    %c0_28 = arith.constant 0 : index
    %c0_29 = arith.constant 0 : index
    %41 = vector.load %arg10[%c0_28, %c0_29] : memref<1x128xf32, #tpu.memory_space<vmem>>, vector<1x128xf32>
    %42 = vector.broadcast %41 : vector<1x128xf32> to vector<8x128xf32>
    %43 = arith.addf %40, %42 : vector<8x128xf32>
    %cst_30 = arith.constant 0.000000e+00 : f32
    %44 = vector.broadcast %cst_30 : f32 to vector<8x128xf32>
    %45 = arith.maximumf %43, %44 : vector<8x128xf32>
    %46 = arith.truncf %45 : vector<8x128xf32> to vector<8x128xbf16>
    %c0_31 = arith.constant 0 : index
    %c0_32 = arith.constant 0 : index
    %47 = vector.load %arg11[%c0_31, %c0_32] : memref<128x256xbf16, #tpu.memory_space<vmem>>, vector<128x256xbf16>
    %cst_33 = arith.constant dense<0.000000e+00> : vector<8x256xf32>
    %48 = tpu.matmul %46, %47, %cst_33 {dimension_numbers = #tpu.dot_dimension_numbers<[1], [0], [0], [1], [0, 0, 1, 1], [], []>} : vector<8x128xbf16>, vector<128x256xbf16>, vector<8x256xf32> -> vector<8x256xf32>
    %c0_34 = arith.constant 0 : index
    %c0_35 = arith.constant 0 : index
    %49 = vector.load %arg12[%c0_34, %c0_35] : memref<1x256xf32, #tpu.memory_space<vmem>>, vector<1x256xf32>
    %50 = vector.broadcast %49 : vector<1x256xf32> to vector<8x256xf32>
    %51 = arith.addf %48, %50 : vector<8x256xf32>
    %cst_36 = arith.constant 0.000000e+00 : f32
    %52 = vector.broadcast %cst_36 : f32 to vector<8x256xf32>
    %53 = arith.maximumf %51, %52 : vector<8x256xf32>
    %54 = arith.truncf %53 : vector<8x256xf32> to vector<8x256xbf16>
    %c0_37 = arith.constant 0 : index
    %c0_38 = arith.constant 0 : index
    %55 = vector.load %arg13[%c0_37, %c0_38] : memref<256x256xbf16, #tpu.memory_space<vmem>>, vector<256x256xbf16>
    %cst_39 = arith.constant dense<0.000000e+00> : vector<8x256xf32>
    %56 = tpu.matmul %54, %55, %cst_39 {dimension_numbers = #tpu.dot_dimension_numbers<[1], [0], [0], [1], [0, 0, 1, 1], [], []>} : vector<8x256xbf16>, vector<256x256xbf16>, vector<8x256xf32> -> vector<8x256xf32>
    %c0_40 = arith.constant 0 : index
    %c0_41 = arith.constant 0 : index
    %57 = vector.load %arg14[%c0_40, %c0_41] : memref<1x256xf32, #tpu.memory_space<vmem>>, vector<1x256xf32>
    %58 = vector.broadcast %57 : vector<1x256xf32> to vector<8x256xf32>
    %59 = arith.addf %56, %58 : vector<8x256xf32>
    %60 = arith.negf %59 : vector<8x256xf32>
    %61 = math.exp %60 : vector<8x256xf32>
    %cst_42 = arith.constant 1.000000e+00 : f32
    %62 = vector.broadcast %cst_42 : f32 to vector<8x256xf32>
    %63 = arith.addf %62, %61 : vector<8x256xf32>
    %64 = arith.divf %62, %63 : vector<8x256xf32>
    %c0_43 = arith.constant 0 : index
    %c0_44 = arith.constant 0 : index
    %65 = vector.load %arg15[%c0_43, %c0_44] : memref<8x256xf32, #tpu.memory_space<vmem>>, vector<8x256xf32>
    tpu.vector_store %arg15[%c0_43, %c0_44], %64 {strides = array<i32>} : memref<8x256xf32, #tpu.memory_space<vmem>>, vector<8x256xf32>,
    return
  }
  func.func @transform_0(%arg0: i32) -> (i32, i32) {
    %c0_i32 = arith.constant 0 : i32
    %c0_i32_0 = arith.constant 0 : i32
    return %arg0, %c0_i32 : i32, i32
  }
  func.func @transform_1(%arg0: i32) -> (i32, i32) {
    %c0_i32 = arith.constant 0 : i32
    %c0_i32_0 = arith.constant 0 : i32
    return %arg0, %c0_i32 : i32, i32
  }
  func.func @transform_2(%arg0: i32) -> (i32, i32) {
    %c0_i32 = arith.constant 0 : i32
    %c0_i32_0 = arith.constant 0 : i32
    %c0_i32_1 = arith.constant 0 : i32
    return %c0_i32, %c0_i32_0 : i32, i32
  }
  func.func @transform_3(%arg0: i32) -> (i32, i32) {
    %c0_i32 = arith.constant 0 : i32
    %c0_i32_0 = arith.constant 0 : i32
    %c0_i32_1 = arith.constant 0 : i32
    return %c0_i32, %c0_i32_0 : i32, i32
  }
  func.func @transform_4(%arg0: i32) -> (i32, i32) {
    %c0_i32 = arith.constant 0 : i32
    %c0_i32_0 = arith.constant 0 : i32
    %c0_i32_1 = arith.constant 0 : i32
    return %c0_i32, %c0_i32_0 : i32, i32
  }
  func.func @transform_5(%arg0: i32) -> (i32, i32) {
    %c0_i32 = arith.constant 0 : i32
    %c0_i32_0 = arith.constant 0 : i32
    %c0_i32_1 = arith.constant 0 : i32
    return %c0_i32, %c0_i32_0 : i32, i32
  }
  func.func @transform_6(%arg0: i32) -> (i32, i32) {
    %c0_i32 = arith.constant 0 : i32
    %c0_i32_0 = arith.constant 0 : i32
    %c0_i32_1 = arith.constant 0 : i32
    return %c0_i32, %c0_i32_0 : i32, i32
  }
  func.func @transform_7(%arg0: i32) -> (i32, i32) {
    %c0_i32 = arith.constant 0 : i32
    %c0_i32_0 = arith.constant 0 : i32
    %c0_i32_1 = arith.constant 0 : i32
    return %c0_i32, %c0_i32_0 : i32, i32
  }
  func.func @transform_8(%arg0: i32) -> (i32, i32) {
    %c0_i32 = arith.constant 0 : i32
    %c0_i32_0 = arith.constant 0 : i32
    %c0_i32_1 = arith.constant 0 : i32
    return %c0_i32, %c0_i32_0 : i32, i32
  }
  func.func @transform_9(%arg0: i32) -> (i32, i32) {
    %c0_i32 = arith.constant 0 : i32
    %c0_i32_0 = arith.constant 0 : i32
    %c0_i32_1 = arith.constant 0 : i32
    return %c0_i32, %c0_i32_0 : i32, i32
  }
  func.func @transform_10(%arg0: i32) -> (i32, i32) {
    %c0_i32 = arith.constant 0 : i32
    %c0_i32_0 = arith.constant 0 : i32
    %c0_i32_1 = arith.constant 0 : i32
    return %c0_i32, %c0_i32_0 : i32, i32
  }
  func.func @transform_11(%arg0: i32) -> (i32, i32) {
    %c0_i32 = arith.constant 0 : i32
    %c0_i32_0 = arith.constant 0 : i32
    %c0_i32_1 = arith.constant 0 : i32
    return %c0_i32, %c0_i32_0 : i32, i32
  }
  func.func @transform_12(%arg0: i32) -> (i32, i32) {
    %c0_i32 = arith.constant 0 : i32
    %c0_i32_0 = arith.constant 0 : i32
    %c0_i32_1 = arith.constant 0 : i32
    return %c0_i32, %c0_i32_0 : i32, i32
  }
  func.func @transform_13(%arg0: i32) -> (i32, i32) {
    %c0_i32 = arith.constant 0 : i32
    %c0_i32_0 = arith.constant 0 : i32
    %c0_i32_1 = arith.constant 0 : i32
    return %c0_i32, %c0_i32_0 : i32, i32
  }
  func.func @transform_14(%arg0: i32) -> (i32, i32) {
    %c0_i32 = arith.constant 0 : i32
    %c0_i32_0 = arith.constant 0 : i32
    return %arg0, %c0_i32 : i32, i32
  }
  func.func @transform_15(%arg0: i32) -> (i32, i32) {
    %c0_i32 = arith.constant 0 : i32
    %c0_i32_0 = arith.constant 0 : i32
    return %arg0, %c0_i32 : i32, i32
  }
}

</mosaic_0001>

<llo_original>
// kernel: tpu_custom_call.1
$region0: #{tpu_custom_call.1}
  #allocation0 [shape = 'u32[]', space=smem, size = 0x4, offset = 0x4, fixed_abs, tag = 'smem constant byte address 0x4 - core index']
  #allocation1 [shape = 'u32[72,128]{1,0:T(1,128)}', space=vmem, size = 0x9000, scoped, tag = 'internal scratch']
  %s0 = inlined_call_operand.hbm [shape: f32[8,256], index: 0, kind: input, shape index: {}]
  %s1 = inlined_call_operand.hbm [shape: f32[8,128], index: 1, kind: input, shape index: {}]
  %s2 = inlined_call_operand.hbm [shape: bf16[256,256], index: 2, kind: input, shape index: {}]
  %s3 = inlined_call_operand.vmem [shape: f32[1,256], index: 3, kind: input, shape index: {}]
  %s4 = inlined_call_operand.hbm [shape: bf16[256,128], index: 4, kind: input, shape index: {}]
  %s5 = inlined_call_operand.hbm [shape: f32[1,128], index: 5, kind: input, shape index: {}]
  %s6 = inlined_call_operand.hbm [shape: bf16[128,128], index: 6, kind: input, shape index: {}]
  %s7 = inlined_call_operand.hbm [shape: f32[1,128], index: 7, kind: input, shape index: {}]
  %s8 = inlined_call_operand.hbm [shape: bf16[128,128], index: 8, kind: input, shape index: {}]
  %s9 = inlined_call_operand.vmem [shape: f32[1,128], index: 9, kind: input, shape index: {}]
  %s10 = inlined_call_operand.hbm [shape: bf16[128,256], index: 10, kind: input, shape index: {}]
  %s11 = inlined_call_operand.vmem [shape: f32[1,256], index: 11, kind: input, shape index: {}]
  %s12 = inlined_call_operand.hbm [shape: bf16[256,256], index: 12, kind: input, shape index: {}]
  %s13 = inlined_call_operand.vmem [shape: f32[1,256], index: 13, kind: input, shape index: {}]
  %s14 = inlined_call_operand.hbm [shape: f32[8,256], index: 14, kind: output, shape index: {0}]
  %s15 = inlined_call_operand.hbm [shape: f32[8,128], index: 15, kind: output, shape index: {1}]
  %16 = xla_tuple %s14, %s15
  %s17 = sld [smem:[#allocation0]]
  $region114: #{tpu_custom_call.1} parent=0
    _
  %s19 = ssub.s32 1, %s17
  %s20 = scalar_select 0, %s19, %s17
  $region1: #{tpu_custom_call.1} parent=0
    #allocation2 [shape = 'u8[8192]{0}', space=vmem, size = 0x2000, scoped, tag = 'input window, operand 0, single buffered']
    #allocation3 [shape = 's32[1]{0}', space=sflag, size = 0x4, scoped, tag = 'scoped memory for tpu_custom_call.1']
    #allocation4 [shape = 's32[1]{0}', space=sflag, size = 0x4, scoped, tag = 'scoped memory for tpu_custom_call.1']
    #allocation5 [shape = 'u8[4096]{0}', space=vmem, size = 0x1000, scoped, tag = 'input window, operand 1, single buffered']
    #allocation6 [shape = 's32[1]{0}', space=sflag, size = 0x4, scoped, tag = 'scoped memory for tpu_custom_call.1']
    #allocation7 [shape = 'u8[131072]{0}', space=vmem, size = 0x20000, scoped, tag = 'input window, operand 2, single buffered']
    #allocation8 [shape = 'u8[65536]{0}', space=vmem, size = 0x10000, scoped, tag = 'input window, operand 4, single buffered']
    #allocation9 [shape = 's32[1]{0}', space=sflag, size = 0x4, scoped, tag = 'scoped memory for tpu_custom_call.1']
    #allocation10 [shape = 'u8[512]{0}', space=vmem, size = 0x400, scoped, tag = 'input window, operand 5, single buffered']
    #allocation11 [shape = 'u8[32768]{0}', space=vmem, size = 0x8000, scoped, tag = 'input window, operand 6, single buffered']
    #allocation12 [shape = 's32[1]{0}', space=sflag, size = 0x4, scoped, tag = 'scoped memory for tpu_custom_call.1']
    #allocation13 [shape = 'u8[512]{0}', space=vmem, size = 0x400, scoped, tag = 'input window, operand 7, single buffered']
    #allocation14 [shape = 'u8[32768]{0}', space=vmem, size = 0x8000, scoped, tag = 'input window, operand 8, single buffered']
    #allocation15 [shape = 's32[1]{0}', space=sflag, size = 0x4, scoped, tag = 'scoped memory for tpu_custom_call.1']
    #allocation16 [shape = 'u8[65536]{0}', space=vmem, size = 0x10000, scoped, tag = 'input window, operand 10, single buffered']
    #allocation17 [shape = 'u8[131072]{0}', space=vmem, size = 0x20000, scoped, tag = 'input window, operand 12, single buffered']
    #allocation18 [shape = 's32[1]{0}', space=sflag, size = 0x4, scoped, tag = 'scoped memory for tpu_custom_call.1']
    #allocation19 [shape = 'u8[8192]{0}', space=vmem, size = 0x2000, scoped, tag = 'output window, operand 0, single buffered']
    #allocation20 [shape = 'u8[4096]{0}', space=vmem, size = 0x1000, scoped, tag = 'output window, operand 1, single buffered']
    #allocation21 [shape = 's32[1]{0}', space=sflag, size = 0x4, scoped, tag = 'scoped memory for tpu_custom_call.1']
    %21 = vsyncpa [#allocation3], 0
    %22 = vsyncpa [#allocation6], 0
    %23 = vsyncpa [#allocation9], 0
    %24 = vsyncpa [#allocation12], 0
    %25 = vsyncpa [#allocation15], 0
    %26 = vsyncpa [#allocation18], 0
    %27 = vsyncpa [#allocation4], 0
    %28 = vsyncpa [#allocation21], 0
    // Predicated region
    $region2: #{tpu_custom_call.1} parent=1 // pred_check
      _
    $region3: #{tpu_custom_call.1} parent=1 // pred_check_branch
      %30 = sbr.rel (0) target = $region5
    $region4: #{tpu_custom_call.1} parent=1 // pred_region
      %32 = vsyncadd [#allocation3], 0
      %s34 = sshll.u32 %s0, 4
      %s35 = int_to_ptr.hbm [resolvable:$true] %s34
      %s36 = sshll.u32 [#allocation2], 4
      %s37 = int_to_ptr.vmem [resolvable:$true] %s36
      %39 = dma.hbm_to_vmem [thread:$0]  %s35, 256, %s37, [#allocation3]
    $region5: #{tpu_custom_call.1} parent=1 // pred_fallthru
      _
    // Predicated region
    $region6: #{tpu_custom_call.1} parent=1 // pred_check
      _
    $region7: #{tpu_custom_call.1} parent=1 // pred_check_branch
      %41 = sbr.rel (0) target = $region9
    $region8: #{tpu_custom_call.1} parent=1 // pred_region
      %43 = vsyncadd [#allocation6], 0
      %s45 = sshll.u32 %s1, 4
      %s46 = int_to_ptr.hbm [resolvable:$true] %s45
      %s47 = sshll.u32 [#allocation5], 4
      %s48 = int_to_ptr.vmem [resolvable:$true] %s47
      %50 = dma.hbm_to_vmem [thread:$0]  %s46, 128, %s48, [#allocation6]
    $region9: #{tpu_custom_call.1} parent=1 // pred_fallthru
      _
    // Predicated region
    $region10: #{tpu_custom_call.1} parent=1 // pred_check
      _
    $region11: #{tpu_custom_call.1} parent=1 // pred_check_branch
      %52 = sbr.rel (0) target = $region13
    $region12: #{tpu_custom_call.1} parent=1 // pred_region
      %54 = vsyncadd [#allocation6], 0
      %s55 = sshll.u32 %s2, 4
      %s56 = int_to_ptr.hbm [resolvable:$true] %s55
      %s57 = sshll.u32 [#allocation7], 4
      %s58 = int_to_ptr.vmem [resolvable:$true] %s57
      %63 = dma.hbm_to_vmem [thread:$0]  %s56, 4096, %s58, [#allocation6], 128, 128, 8
    $region13: #{tpu_custom_call.1} parent=1 // pred_fallthru
      _
    // Predicated region
    $region14: #{tpu_custom_call.1} parent=1 // pred_check
      _
    $region15: #{tpu_custom_call.1} parent=1 // pred_check_branch
      %65 = sbr.rel (0) target = $region17
    $region16: #{tpu_custom_call.1} parent=1 // pred_region
      _
    $region17: #{tpu_custom_call.1} parent=1 // pred_fallthru
      _
    // Predicated region
    $region18: #{tpu_custom_call.1} parent=1 // pred_check
      _
    $region19: #{tpu_custom_call.1} parent=1 // pred_check_branch
      %67 = sbr.rel (0) target = $region21
    $region20: #{tpu_custom_call.1} parent=1 // pred_region
      %69 = vsyncadd [#allocation9], 0
      %s70 = sshll.u32 %s4, 4
      %s71 = int_to_ptr.hbm [resolvable:$true] %s70
      %s72 = sshll.u32 [#allocation8], 4
      %s73 = int_to_ptr.vmem [resolvable:$true] %s72
      %78 = dma.hbm_to_vmem [thread:$0]  %s71, 2048, %s73, [#allocation9], 64, 64, 4
    $region21: #{tpu_custom_call.1} parent=1 // pred_fallthru
      _
    // Predicated region
    $region22: #{tpu_custom_call.1} parent=1 // pred_check
      _
    $region23: #{tpu_custom_call.1} parent=1 // pred_check_branch
      %80 = sbr.rel (0) target = $region25
    $region24: #{tpu_custom_call.1} parent=1 // pred_region
      %82 = vsyncadd [#allocation9], 0
      %s84 = sshll.u32 %s5, 4
      %s85 = int_to_ptr.hbm [resolvable:$true] %s84
      %s86 = sshll.u32 [#allocation10], 4
      %s87 = int_to_ptr.vmem [resolvable:$true] %s86
      %89 = dma.hbm_to_vmem [thread:$0]  %s85, 16, %s87, [#allocation9]
    $region25: #{tpu_custom_call.1} parent=1 // pred_fallthru
      _
    // Predicated region
    $region26: #{tpu_custom_call.1} parent=1 // pred_check
      _
    $region27: #{tpu_custom_call.1} parent=1 // pred_check_branch
      %91 = sbr.rel (0) target = $region29
    $region28: #{tpu_custom_call.1} parent=1 // pred_region
      %93 = vsyncadd [#allocation12], 0
      %s94 = sshll.u32 %s6, 4
      %s95 = int_to_ptr.hbm [resolvable:$true] %s94
      %s96 = sshll.u32 [#allocation11], 4
      %s97 = int_to_ptr.vmem [resolvable:$true] %s96
      %102 = dma.hbm_to_vmem [thread:$0]  %s95, 1024, %s97, [#allocation12], 64, 64, 4
    $region29: #{tpu_custom_call.1} parent=1 // pred_fallthru
      _
    // Predicated region
    $region30: #{tpu_custom_call.1} parent=1 // pred_check
      _
    $region31: #{tpu_custom_call.1} parent=1 // pred_check_branch
      %104 = sbr.rel (0) target = $region33
    $region32: #{tpu_custom_call.1} parent=1 // pred_region
      %106 = vsyncadd [#allocation12], 0
      %s108 = sshll.u32 %s7, 4
      %s109 = int_to_ptr.hbm [resolvable:$true] %s108
      %s110 = sshll.u32 [#allocation13], 4
      %s111 = int_to_ptr.vmem [resolvable:$true] %s110
      %113 = dma.hbm_to_vmem [thread:$0]  %s109, 16, %s111, [#allocation12]
    $region33: #{tpu_custom_call.1} parent=1 // pred_fallthru
      _
    // Predicated region
    $region34: #{tpu_custom_call.1} parent=1 // pred_check
      _
    $region35: #{tpu_custom_call.1} parent=1 // pred_check_branch
      %115 = sbr.rel (0) target = $region37
    $region36: #{tpu_custom_call.1} parent=1 // pred_region
      %117 = vsyncadd [#allocation15], 0
      %s118 = sshll.u32 %s8, 4
      %s119 = int_to_ptr.hbm [resolvable:$true] %s118
      %s120 = sshll.u32 [#allocation14], 4
      %s121 = int_to_ptr.vmem [resolvable:$true] %s120
      %126 = dma.hbm_to_vmem [thread:$0]  %s119, 1024, %s121, [#allocation15], 64, 64, 4
    $region37: #{tpu_custom_call.1} parent=1 // pred_fallthru
      _
    // Predicated region
    $region38: #{tpu_custom_call.1} parent=1 // pred_check
      _
    $region39: #{tpu_custom_call.1} parent=1 // pred_check_branch
      %128 = sbr.rel (0) target = $region41
    $region40: #{tpu_custom_call.1} parent=1 // pred_region
      _
    $region41: #{tpu_custom_call.1} parent=1 // pred_fallthru
      _
    // Predicated region
    $region42: #{tpu_custom_call.1} parent=1 // pred_check
      _
    $region43: #{tpu_custom_call.1} parent=1 // pred_check_branch
      %130 = sbr.rel (0) target = $region45
    $region44: #{tpu_custom_call.1} parent=1 // pred_region
      %132 = vsyncadd [#allocation15], 0
      %s133 = sshll.u32 %s10, 4
      %s134 = int_to_ptr.hbm [resolvable:$true] %s133
      %s135 = sshll.u32 [#allocation16], 4
      %s136 = int_to_ptr.vmem [resolvable:$true] %s135
      %141 = dma.hbm_to_vmem [thread:$0]  %s134, 2048, %s136, [#allocation15], 128, 128, 8
    $region45: #{tpu_custom_call.1} parent=1 // pred_fallthru
      _
    // Predicated region
    $region46: #{tpu_custom_call.1} parent=1 // pred_check
      _
    $region47: #{tpu_custom_call.1} parent=1 // pred_check_branch
      %143 = sbr.rel (0) target = $region49
    $region48: #{tpu_custom_call.1} parent=1 // pred_region
      _
    $region49: #{tpu_custom_call.1} parent=1 // pred_fallthru
      _
    // Predicated region
    $region50: #{tpu_custom_call.1} parent=1 // pred_check
      _
    $region51: #{tpu_custom_call.1} parent=1 // pred_check_branch
      %145 = sbr.rel (0) target = $region53
    $region52: #{tpu_custom_call.1} parent=1 // pred_region
      %147 = vsyncadd [#allocation18], 0
      %s148 = sshll.u32 %s12, 4
      %s149 = int_to_ptr.hbm [resolvable:$true] %s148
      %s150 = sshll.u32 [#allocation17], 4
      %s151 = int_to_ptr.vmem [resolvable:$true] %s150
      %156 = dma.hbm_to_vmem [thread:$0]  %s149, 4096, %s151, [#allocation18], 128, 128, 8
    $region53: #{tpu_custom_call.1} parent=1 // pred_fallthru
      _
    // Predicated region
    $region54: #{tpu_custom_call.1} parent=1 // pred_check
      _
    $region55: #{tpu_custom_call.1} parent=1 // pred_check_branch
      %158 = sbr.rel (0) target = $region57
    $region56: #{tpu_custom_call.1} parent=1 // pred_region
      _
    $region57: #{tpu_custom_call.1} parent=1 // pred_fallthru
      _
    // Predicated region
    $region58: #{tpu_custom_call.1} parent=1 // pred_check
      _
    $region59: #{tpu_custom_call.1} parent=1 // pred_check_branch
      %160 = sbr.rel (0) target = $region61
    $region60: #{tpu_custom_call.1} parent=1 // pred_region
      %162 = dma.done [#allocation3], 256
    $region61: #{tpu_custom_call.1} parent=1 // pred_fallthru
      _
    // Predicated region
    $region62: #{tpu_custom_call.1} parent=1 // pred_check
      _
    $region63: #{tpu_custom_call.1} parent=1 // pred_check_branch
      %164 = sbr.rel (0) target = $region65
    $region64: #{tpu_custom_call.1} parent=1 // pred_region
      %166 = dma.done [#allocation6], 128
    $region65: #{tpu_custom_call.1} parent=1 // pred_fallthru
      _
    // Predicated region
    $region66: #{tpu_custom_call.1} parent=1 // pred_check
      _
    $region67: #{tpu_custom_call.1} parent=1 // pred_check_branch
      %168 = sbr.rel (0) target = $region69
    $region68: #{tpu_custom_call.1} parent=1 // pred_region
      %170 = dma.done [#allocation6], 4096
    $region69: #{tpu_custom_call.1} parent=1 // pred_fallthru
      _
    // Predicated region
    $region70: #{tpu_custom_call.1} parent=1 // pred_check
      _
    $region71: #{tpu_custom_call.1} parent=1 // pred_check_branch
      %172 = sbr.rel (0) target = $region73
    $region72: #{tpu_custom_call.1} parent=1 // pred_region
      %174 = dma.done [#allocation9], 2048
    $region73: #{tpu_custom_call.1} parent=1 // pred_fallthru
      _
    // Predicated region
    $region74: #{tpu_custom_call.1} parent=1 // pred_check
      _
    $region75: #{tpu_custom_call.1} parent=1 // pred_check_branch
      %176 = sbr.rel (0) target = $region77
    $region76: #{tpu_custom_call.1} parent=1 // pred_region
      %178 = dma.done [#allocation9], 16
    $region77: #{tpu_custom_call.1} parent=1 // pred_fallthru
      _
    // Predicated region
    $region78: #{tpu_custom_call.1} parent=1 // pred_check
      _
    $region79: #{tpu_custom_call.1} parent=1 // pred_check_branch
      %180 = sbr.rel (0) target = $region81
    $region80: #{tpu_custom_call.1} parent=1 // pred_region
      %182 = dma.done [#allocation12], 1024
    $region81: #{tpu_custom_call.1} parent=1 // pred_fallthru
      _
    // Predicated region
    $region82: #{tpu_custom_call.1} parent=1 // pred_check
      _
    $region83: #{tpu_custom_call.1} parent=1 // pred_check_branch
      %184 = sbr.rel (0) target = $region85
    $region84: #{tpu_custom_call.1} parent=1 // pred_region
      %186 = dma.done [#allocation12], 16
    $region85: #{tpu_custom_call.1} parent=1 // pred_fallthru
      _
    // Predicated region
    $region86: #{tpu_custom_call.1} parent=1 // pred_check
      _
    $region87: #{tpu_custom_call.1} parent=1 // pred_check_branch
      %188 = sbr.rel (0) target = $region89
    $region88: #{tpu_custom_call.1} parent=1 // pred_region
      %190 = dma.done [#allocation15], 1024
    $region89: #{tpu_custom_call.1} parent=1 // pred_fallthru
      _
    // Predicated region
    $region90: #{tpu_custom_call.1} parent=1 // pred_check
      _
    $region91: #{tpu_custom_call.1} parent=1 // pred_check_branch
      %192 = sbr.rel (0) target = $region93
    $region92: #{tpu_custom_call.1} parent=1 // pred_region
      %194 = dma.done [#allocation15], 2048
    $region93: #{tpu_custom_call.1} parent=1 // pred_fallthru
      _
    // Predicated region
    $region94: #{tpu_custom_call.1} parent=1 // pred_check
      _
    $region95: #{tpu_custom_call.1} parent=1 // pred_check_branch
      %196 = sbr.rel (0) target = $region97
    $region96: #{tpu_custom_call.1} parent=1 // pred_region
      %198 = dma.done [#allocation18], 4096
    $region97: #{tpu_custom_call.1} parent=1 // pred_fallthru
      _
    %v199 = vld [vmem:[#allocation2] sm:$0xff]
    %v200 = vld [vmem:[#allocation2 + $0x8] sm:$0xff]
    %v201 = vpack.c.bf16 %v199, %v199
    %v202 = vpack.c.bf16 %v200, %v200
    %v203 = vld [vmem:[#allocation7] sm:$0xff]
    %v204 = vld [vmem:[#allocation7 + $0x8] sm:$0xff]
    %v205 = vld [vmem:[#allocation7 + $0x10] sm:$0xff]
    %v206 = vld [vmem:[#allocation7 + $0x18] sm:$0xff]
    %v207 = vld [vmem:[#allocation7 + $0x20] sm:$0xff]
    %v208 = vld [vmem:[#allocation7 + $0x28] sm:$0xff]
    %v209 = vld [vmem:[#allocation7 + $0x30] sm:$0xff]
    %v210 = vld [vmem:[#allocation7 + $0x38] sm:$0xff]
    %v211 = vld [vmem:[#allocation7 + $0x40] sm:$0xff]
    %v212 = vld [vmem:[#allocation7 + $0x48] sm:$0xff]
    %v213 = vld [vmem:[#allocation7 + $0x50] sm:$0xff]
    %v214 = vld [vmem:[#allocation7 + $0x58] sm:$0xff]
    %v215 = vld [vmem:[#allocation7 + $0x60] sm:$0xff]
    %v216 = vld [vmem:[#allocation7 + $0x68] sm:$0xff]
    %v217 = vld [vmem:[#allocation7 + $0x70] sm:$0xff]
    %v218 = vld [vmem:[#allocation7 + $0x78] sm:$0xff]
    %v219 = vld [vmem:[#allocation7 + $0x80] sm:$0xff]
    %v220 = vld [vmem:[#allocation7 + $0x88] sm:$0xff]
    %v221 = vld [vmem:[#allocation7 + $0x90] sm:$0xff]
    %v222 = vld [vmem:[#allocation7 + $0x98] sm:$0xff]
    %v223 = vld [vmem:[#allocation7 + $0xa0] sm:$0xff]
    %v224 = vld [vmem:[#allocation7 + $0xa8] sm:$0xff]
    %v225 = vld [vmem:[#allocation7 + $0xb0] sm:$0xff]
    %v226 = vld [vmem:[#allocation7 + $0xb8] sm:$0xff]
    %v227 = vld [vmem:[#allocation7 + $0xc0] sm:$0xff]
    %v228 = vld [vmem:[#allocation7 + $0xc8] sm:$0xff]
    %v229 = vld [vmem:[#allocation7 + $0xd0] sm:$0xff]
    %v230 = vld [vmem:[#allocation7 + $0xd8] sm:$0xff]
    %v231 = vld [vmem:[#allocation7 + $0xe0] sm:$0xff]
    %v232 = vld [vmem:[#allocation7 + $0xe8] sm:$0xff]
    %v233 = vld [vmem:[#allocation7 + $0xf0] sm:$0xff]
    %v234 = vld [vmem:[#allocation7 + $0xf8] sm:$0xff]
    %v235 = vld [vmem:[%s3] sm:$0x3]
    %v237 = vperm.slane %v235, 0
    %v238 = vperm.slane %v235, 1
    %v273 = vunpack.c.l.b16 %v203
    %v274 = vunpack.c.h.b16 %v203
    %v275 = vunpack.c.l.b16 %v204
    %v276 = vunpack.c.h.b16 %v204
    %v277 = vunpack.c.l.b16 %v205
    %v278 = vunpack.c.h.b16 %v205
    %v279 = vunpack.c.l.b16 %v206
    %v280 = vunpack.c.h.b16 %v206
    %v281 = vunpack.c.l.b16 %v207
    %v282 = vunpack.c.h.b16 %v207
    %v283 = vunpack.c.l.b16 %v208
    %v284 = vunpack.c.h.b16 %v208
    %v285 = vunpack.c.l.b16 %v209
    %v286 = vunpack.c.h.b16 %v209
    %v287 = vunpack.c.l.b16 %v210
    %v288 = vunpack.c.h.b16 %v210
    %v289 = vunpack.c.l.b16 %v211
    %v290 = vunpack.c.h.b16 %v211
    %v291 = vunpack.c.l.b16 %v212
    %v292 = vunpack.c.h.b16 %v212
    %v293 = vunpack.c.l.b16 %v213
    %v294 = vunpack.c.h.b16 %v213
    %v295 = vunpack.c.l.b16 %v214
    %v296 = vunpack.c.h.b16 %v214
    %v297 = vunpack.c.l.b16 %v215
    %v298 = vunpack.c.h.b16 %v215
    %v299 = vunpack.c.l.b16 %v216
    %v300 = vunpack.c.h.b16 %v216
    %v301 = vunpack.c.l.b16 %v217
    %v302 = vunpack.c.h.b16 %v217
    %v303 = vunpack.c.l.b16 %v218
    %v304 = vunpack.c.h.b16 %v218
    %v305 = vunpack.c.l.b16 %v219
    %v306 = vunpack.c.h.b16 %v219
    %v307 = vunpack.c.l.b16 %v220
    %v308 = vunpack.c.h.b16 %v220
    %v309 = vunpack.c.l.b16 %v221
    %v310 = vunpack.c.h.b16 %v221
    %v311 = vunpack.c.l.b16 %v222
    %v312 = vunpack.c.h.b16 %v222
    %v313 = vunpack.c.l.b16 %v223
    %v314 = vunpack.c.h.b16 %v223
    %v315 = vunpack.c.l.b16 %v224
    %v316 = vunpack.c.h.b16 %v224
    %v317 = vunpack.c.l.b16 %v225
    %v318 = vunpack.c.h.b16 %v225
    %v319 = vunpack.c.l.b16 %v226
    %v320 = vunpack.c.h.b16 %v226
    %v321 = vunpack.c.l.b16 %v227
    %v322 = vunpack.c.h.b16 %v227
    %v323 = vunpack.c.l.b16 %v228
    %v324 = vunpack.c.h.b16 %v228
    %v325 = vunpack.c.l.b16 %v229
    %v326 = vunpack.c.h.b16 %v229
    %v327 = vunpack.c.l.b16 %v230
    %v328 = vunpack.c.h.b16 %v230
    %v329 = vunpack.c.l.b16 %v231
    %v330 = vunpack.c.h.b16 %v231
    %v331 = vunpack.c.l.b16 %v232
    %v332 = vunpack.c.h.b16 %v232
    %v333 = vunpack.c.l.b16 %v233
    %v334 = vunpack.c.h.b16 %v233
    %v335 = vunpack.c.l.b16 %v234
    %v336 = vunpack.c.h.b16 %v234
    %v337 = vpack.c.b16 %v275, %v273
    %v338 = vpack.c.b16 %v276, %v274
    %v339 = vpack.c.b16 %v279, %v277
    %v340 = vpack.c.b16 %v280, %v278
    %v341 = vpack.c.b16 %v283, %v281
    %v342 = vpack.c.b16 %v284, %v282
    %v343 = vpack.c.b16 %v287, %v285
    %v344 = vpack.c.b16 %v288, %v286
    %v345 = vpack.c.b16 %v291, %v289
    %v346 = vpack.c.b16 %v292, %v290
    %v347 = vpack.c.b16 %v295, %v293
    %v348 = vpack.c.b16 %v296, %v294
    %v349 = vpack.c.b16 %v299, %v297
    %v350 = vpack.c.b16 %v300, %v298
    %v351 = vpack.c.b16 %v303, %v301
    %v352 = vpack.c.b16 %v304, %v302
    %v353 = vpack.c.b16 %v307, %v305
    %v354 = vpack.c.b16 %v308, %v306
    %v355 = vpack.c.b16 %v311, %v309
    %v356 = vpack.c.b16 %v312, %v310
    %v357 = vpack.c.b16 %v315, %v313
    %v358 = vpack.c.b16 %v316, %v314
    %v359 = vpack.c.b16 %v319, %v317
    %v360 = vpack.c.b16 %v320, %v318
    %v361 = vpack.c.b16 %v323, %v321
    %v362 = vpack.c.b16 %v324, %v322
    %v363 = vpack.c.b16 %v327, %v325
    %v364 = vpack.c.b16 %v328, %v326
    %v365 = vpack.c.b16 %v331, %v329
    %v366 = vpack.c.b16 %v332, %v330
    %v367 = vpack.c.b16 %v335, %v333
    %v368 = vpack.c.b16 %v336, %v334
    %401 = vmatpush.bf16.msra.mxu0 %v351
    %402 = vmatpush.bf16.msra.mxu0 %v349
    %403 = vmatpush.bf16.msra.mxu0 %v347
    %404 = vmatpush.bf16.msra.mxu0 %v345
    %405 = vmatpush.bf16.msra.mxu0 %v343
    %406 = vmatpush.bf16.msra.mxu0 %v341
    %407 = vmatpush.bf16.msra.mxu0 %v339
    %408 = vmatpush.bf16.msra.mxu0 %v337
    %409 = vmatmul.bf16.gmra.mxu0 %v201
    %v410 = vpop.f32.mrf.mxu0
    %v411 = vadd.f32 %v237, %v410
    %v412 = vpop.f32.mrf.mxu0
    %413 = vdwg.mxu0
    %414 = vmatpush.bf16.msra.mxu0 %v367
    %415 = vmatpush.bf16.msra.mxu0 %v365
    %416 = vmatpush.bf16.msra.mxu0 %v363
    %417 = vmatpush.bf16.msra.mxu0 %v361
    %418 = vmatpush.bf16.msra.mxu0 %v359
    %419 = vmatpush.bf16.msra.mxu0 %v357
    %420 = vmatpush.bf16.msra.mxu0 %v355
    %421 = vmatpush.bf16.msra.mxu0 %v353
    %422 = vmatmul.bf16.gmra.mxu0 %v202
    %v423 = vpop.f32.mrf.mxu0
    %v424 = vadd.f32 %v411, %v423
    %v425 = vpop.f32.mrf.mxu0
    %426 = vdwg.mxu0
    %427 = vmatpush.bf16.msra.mxu0 %v352
    %428 = vmatpush.bf16.msra.mxu0 %v350
    %429 = vmatpush.bf16.msra.mxu0 %v348
    %430 = vmatpush.bf16.msra.mxu0 %v346
    %431 = vmatpush.bf16.msra.mxu0 %v344
    %432 = vmatpush.bf16.msra.mxu0 %v342
    %433 = vmatpush.bf16.msra.mxu0 %v340
    %434 = vmatpush.bf16.msra.mxu0 %v338
    %435 = vmatmul.bf16.gmra.mxu0 %v201
    %v436 = vpop.f32.mrf.mxu0
    %v437 = vadd.f32 %v238, %v436
    %v438 = vpop.f32.mrf.mxu0
    %439 = vdwg.mxu0
    %440 = vmatpush.bf16.msra.mxu0 %v368
    %441 = vmatpush.bf16.msra.mxu0 %v366
    %442 = vmatpush.bf16.msra.mxu0 %v364
    %443 = vmatpush.bf16.msra.mxu0 %v362
    %444 = vmatpush.bf16.msra.mxu0 %v360
    %445 = vmatpush.bf16.msra.mxu0 %v358
    %446 = vmatpush.bf16.msra.mxu0 %v356
    %447 = vmatpush.bf16.msra.mxu0 %v354
    %448 = vmatmul.bf16.gmra.mxu0 %v202
    %v449 = vpop.f32.mrf.mxu0
    %v450 = vadd.f32 %v437, %v449
    %v451 = vpop.f32.mrf.mxu0
    %452 = vdwg.mxu0
    %v453 = vmax.f32 %v424, 0.0
    %v454 = vmax.f32 %v450, 0.0
    %v455 = vpack.c.bf16 %v453, %v453
    %v456 = vpack.c.bf16 %v454, %v454
    %v457 = vld [vmem:[#allocation8] sm:$0xf]
    %v458 = vld [vmem:[#allocation8 + $0x4] sm:$0xf]
    %v459 = vld [vmem:[#allocation8 + $0x8] sm:$0xf]
    %v460 = vld [vmem:[#allocation8 + $0xc] sm:$0xf]
    %v461 = vld [vmem:[#allocation8 + $0x10] sm:$0xf]
    %v462 = vld [vmem:[#allocation8 + $0x14] sm:$0xf]
    %v463 = vld [vmem:[#allocation8 + $0x18] sm:$0xf]
    %v464 = vld [vmem:[#allocation8 + $0x1c] sm:$0xf]
    %v465 = vld [vmem:[#allocation8 + $0x20] sm:$0xf]
    %v466 = vld [vmem:[#allocation8 + $0x24] sm:$0xf]
    %v467 = vld [vmem:[#allocation8 + $0x28] sm:$0xf]
    %v468 = vld [vmem:[#allocation8 + $0x2c] sm:$0xf]
    %v469 = vld [vmem:[#allocation8 + $0x30] sm:$0xf]
    %v470 = vld [vmem:[#allocation8 + $0x34] sm:$0xf]
    %v471 = vld [vmem:[#allocation8 + $0x38] sm:$0xf]
    %v472 = vld [vmem:[#allocation8 + $0x3c] sm:$0xf]
    %v473 = vld [vmem:[#allocation8 + $0x40] sm:$0xf]
    %v474 = vld [vmem:[#allocation8 + $0x44] sm:$0xf]
    %v475 = vld [vmem:[#allocation8 + $0x48] sm:$0xf]
    %v476 = vld [vmem:[#allocation8 + $0x4c] sm:$0xf]
    %v477 = vld [vmem:[#allocation8 + $0x50] sm:$0xf]
    %v478 = vld [vmem:[#allocation8 + $0x54] sm:$0xf]
    %v479 = vld [vmem:[#allocation8 + $0x58] sm:$0xf]
    %v480 = vld [vmem:[#allocation8 + $0x5c] sm:$0xf]
    %v481 = vld [vmem:[#allocation8 + $0x60] sm:$0xf]
    %v482 = vld [vmem:[#allocation8 + $0x64] sm:$0xf]
    %v483 = vld [vmem:[#allocation8 + $0x68] sm:$0xf]
    %v484 = vld [vmem:[#allocation8 + $0x6c] sm:$0xf]
    %v485 = vld [vmem:[#allocation8 + $0x70] sm:$0xf]
    %v486 = vld [vmem:[#allocation8 + $0x74] sm:$0xf]
    %v487 = vld [vmem:[#allocation8 + $0x78] sm:$0xf]
    %v488 = vld [vmem:[#allocation8 + $0x7c] sm:$0xf]
    %v489 = vld [vmem:[#allocation10] sm:$0x1]
    %v491 = vperm.slane %v489, 0
    %v525 = vunpack.c.l.b16 %v457
    %v526 = vunpack.c.l.b16 %v458
    %v527 = vunpack.c.l.b16 %v459
    %v528 = vunpack.c.l.b16 %v460
    %v529 = vunpack.c.l.b16 %v461
    %v530 = vunpack.c.l.b16 %v462
    %v531 = vunpack.c.l.b16 %v463
    %v532 = vunpack.c.l.b16 %v464
    %v533 = vunpack.c.l.b16 %v465
    %v534 = vunpack.c.l.b16 %v466
    %v535 = vunpack.c.l.b16 %v467
    %v536 = vunpack.c.l.b16 %v468
    %v537 = vunpack.c.l.b16 %v469
    %v538 = vunpack.c.l.b16 %v470
    %v539 = vunpack.c.l.b16 %v471
    %v540 = vunpack.c.l.b16 %v472
    %v541 = vunpack.c.l.b16 %v473
    %v542 = vunpack.c.l.b16 %v474
    %v543 = vunpack.c.l.b16 %v475
    %v544 = vunpack.c.l.b16 %v476
    %v545 = vunpack.c.l.b16 %v477
    %v546 = vunpack.c.l.b16 %v478
    %v547 = vunpack.c.l.b16 %v479
    %v548 = vunpack.c.l.b16 %v480
    %v549 = vunpack.c.l.b16 %v481
    %v550 = vunpack.c.l.b16 %v482
    %v551 = vunpack.c.l.b16 %v483
    %v552 = vunpack.c.l.b16 %v484
    %v553 = vunpack.c.l.b16 %v485
    %v554 = vunpack.c.l.b16 %v486
    %v555 = vunpack.c.l.b16 %v487
    %v556 = vunpack.c.l.b16 %v488
    %v557 = vpack.c.b16 %v526, %v525
    %v558 = vpack.c.b16 %v528, %v527
    %v559 = vpack.c.b16 %v530, %v529
    %v560 = vpack.c.b16 %v532, %v531
    %v561 = vpack.c.b16 %v534, %v533
    %v562 = vpack.c.b16 %v536, %v535
    %v563 = vpack.c.b16 %v538, %v537
    %v564 = vpack.c.b16 %v540, %v539
    %v565 = vpack.c.b16 %v542, %v541
    %v566 = vpack.c.b16 %v544, %v543
    %v567 = vpack.c.b16 %v546, %v545
    %v568 = vpack.c.b16 %v548, %v547
    %v569 = vpack.c.b16 %v550, %v549
    %v570 = vpack.c.b16 %v552, %v551
    %v571 = vpack.c.b16 %v554, %v553
    %v572 = vpack.c.b16 %v556, %v555
    %589 = vmatpush.bf16.msra.mxu0 %v564
    %590 = vmatpush.bf16.msra.mxu0 %v563
    %591 = vmatpush.bf16.msra.mxu0 %v562
    %592 = vmatpush.bf16.msra.mxu0 %v561
    %593 = vmatpush.bf16.msra.mxu0 %v560
    %594 = vmatpush.bf16.msra.mxu0 %v559
    %595 = vmatpush.bf16.msra.mxu0 %v558
    %596 = vmatpush.bf16.msra.mxu0 %v557
    %597 = vmatmul.bf16.gmra.mxu0 %v455
    %v598 = vpop.f32.mrf.mxu0
    %v599 = vadd.f32 %v491, %v598
    %v600 = vpop.f32.mrf.mxu0
    %601 = vdwg.mxu0
    %602 = vmatpush.bf16.msra.mxu0 %v572
    %603 = vmatpush.bf16.msra.mxu0 %v571
    %604 = vmatpush.bf16.msra.mxu0 %v570
    %605 = vmatpush.bf16.msra.mxu0 %v569
    %606 = vmatpush.bf16.msra.mxu0 %v568
    %607 = vmatpush.bf16.msra.mxu0 %v567
    %608 = vmatpush.bf16.msra.mxu0 %v566
    %609 = vmatpush.bf16.msra.mxu0 %v565
    %610 = vmatmul.bf16.gmra.mxu0 %v456
    %v611 = vpop.f32.mrf.mxu0
    %v612 = vadd.f32 %v599, %v611
    %v613 = vpop.f32.mrf.mxu0
    %614 = vdwg.mxu0
    %v615 = vmax.f32 %v612, 0.0
    %v616 = vpack.c.bf16 %v615, %v615
    %v617 = vld [vmem:[#allocation11] sm:$0xf]
    %v618 = vld [vmem:[#allocation11 + $0x4] sm:$0xf]
    %v619 = vld [vmem:[#allocation11 + $0x8] sm:$0xf]
    %v620 = vld [vmem:[#allocation11 + $0xc] sm:$0xf]
    %v621 = vld [vmem:[#allocation11 + $0x10] sm:$0xf]
    %v622 = vld [vmem:[#allocation11 + $0x14] sm:$0xf]
    %v623 = vld [vmem:[#allocation11 + $0x18] sm:$0xf]
    %v624 = vld [vmem:[#allocation11 + $0x1c] sm:$0xf]
    %v625 = vld [vmem:[#allocation11 + $0x20] sm:$0xf]
    %v626 = vld [vmem:[#allocation11 + $0x24] sm:$0xf]
    %v627 = vld [vmem:[#allocation11 + $0x28] sm:$0xf]
    %v628 = vld [vmem:[#allocation11 + $0x2c] sm:$0xf]
    %v629 = vld [vmem:[#allocation11 + $0x30] sm:$0xf]
    %v630 = vld [vmem:[#allocation11 + $0x34] sm:$0xf]
    %v631 = vld [vmem:[#allocation11 + $0x38] sm:$0xf]
    %v632 = vld [vmem:[#allocation11 + $0x3c] sm:$0xf]
    %v633 = vld [vmem:[#allocation13] sm:$0x1]
    %v635 = vperm.slane %v633, 0
    %v653 = vunpack.c.l.b16 %v617
    %v654 = vunpack.c.l.b16 %v618
    %v655 = vunpack.c.l.b16 %v619
    %v656 = vunpack.c.l.b16 %v620
    %v657 = vunpack.c.l.b16 %v621
    %v658 = vunpack.c.l.b16 %v622
    %v659 = vunpack.c.l.b16 %v623
    %v660 = vunpack.c.l.b16 %v624
    %v661 = vunpack.c.l.b16 %v625
    %v662 = vunpack.c.l.b16 %v626
    %v663 = vunpack.c.l.b16 %v627
    %v664 = vunpack.c.l.b16 %v628
    %v665 = vunpack.c.l.b16 %v629
    %v666 = vunpack.c.l.b16 %v630
    %v667 = vunpack.c.l.b16 %v631
    %v668 = vunpack.c.l.b16 %v632
    %v669 = vpack.c.b16 %v654, %v653
    %v670 = vpack.c.b16 %v656, %v655
    %v671 = vpack.c.b16 %v658, %v657
    %v672 = vpack.c.b16 %v660, %v659
    %v673 = vpack.c.b16 %v662, %v661
    %v674 = vpack.c.b16 %v664, %v663
    %v675 = vpack.c.b16 %v666, %v665
    %v676 = vpack.c.b16 %v668, %v667
    %685 = vmatpush.bf16.msra.mxu0 %v676
    %686 = vmatpush.bf16.msra.mxu0 %v675
    %687 = vmatpush.bf16.msra.mxu0 %v674
    %688 = vmatpush.bf16.msra.mxu0 %v673
    %689 = vmatpush.bf16.msra.mxu0 %v672
    %690 = vmatpush.bf16.msra.mxu0 %v671
    %691 = vmatpush.bf16.msra.mxu0 %v670
    %692 = vmatpush.bf16.msra.mxu0 %v669
    %693 = vmatmul.bf16.gmra.mxu0 %v616
    %v694 = vpop.f32.mrf.mxu0
    %v695 = vadd.f32 %v635, %v694
    %v696 = vpop.f32.mrf.mxu0
    %697 = vdwg.mxu0
    %698 = vst [vmem:[#allocation20] sm:$0xff] %v695
    %v699 = vlaneseq
    %v700 = vand.u32 %v699, 127
    %vm701 = vcmp.lt.s32.totalorder %v700, 64
    %v702 = vsel %vm701, %v695, 0.0
    %703 = vrot.lane.b32.xlu0 %v695, 64
    %v704 = vpop.permute.xlu0 %703
    %v705 = vmul.f32 %v704, 0.5
    %v706 = vmul.f32 %v705, 1.442695
    %v707 = vpow.pop %v706
    %v708 = vsel %vm701, %v707, 0.0
    %v709 = vld [vmem:[#allocation5] sm:$0xff]
    %v710 = vmul.f32 %v709, %v708
    %v711 = vadd.f32 %v702, %v710
    %v712 = vpack.c.bf16 %v711, %v711
    %v713 = vld [vmem:[#allocation14] sm:$0xf]
    %v714 = vld [vmem:[#allocation14 + $0x4] sm:$0xf]
    %v715 = vld [vmem:[#allocation14 + $0x8] sm:$0xf]
    %v716 = vld [vmem:[#allocation14 + $0xc] sm:$0xf]
    %v717 = vld [vmem:[#allocation14 + $0x10] sm:$0xf]
    %v718 = vld [vmem:[#allocation14 + $0x14] sm:$0xf]
    %v719 = vld [vmem:[#allocation14 + $0x18] sm:$0xf]
    %v720 = vld [vmem:[#allocation14 + $0x1c] sm:$0xf]
    %v721 = vld [vmem:[#allocation14 + $0x20] sm:$0xf]
    %v722 = vld [vmem:[#allocation14 + $0x24] sm:$0xf]
    %v723 = vld [vmem:[#allocation14 + $0x28] sm:$0xf]
    %v724 = vld [vmem:[#allocation14 + $0x2c] sm:$0xf]
    %v725 = vld [vmem:[#allocation14 + $0x30] sm:$0xf]
    %v726 = vld [vmem:[#allocation14 + $0x34] sm:$0xf]
    %v727 = vld [vmem:[#allocation14 + $0x38] sm:$0xf]
    %v728 = vld [vmem:[#allocation14 + $0x3c] sm:$0xf]
    %v729 = vld [vmem:[%s9] sm:$0x1]
    %v731 = vperm.slane %v729, 0
    %v749 = vunpack.c.l.b16 %v713
    %v750 = vunpack.c.l.b16 %v714
    %v751 = vunpack.c.l.b16 %v715
    %v752 = vunpack.c.l.b16 %v716
    %v753 = vunpack.c.l.b16 %v717
    %v754 = vunpack.c.l.b16 %v718
    %v755 = vunpack.c.l.b16 %v719
    %v756 = vunpack.c.l.b16 %v720
    %v757 = vunpack.c.l.b16 %v721
    %v758 = vunpack.c.l.b16 %v722
    %v759 = vunpack.c.l.b16 %v723
    %v760 = vunpack.c.l.b16 %v724
    %v761 = vunpack.c.l.b16 %v725
    %v762 = vunpack.c.l.b16 %v726
    %v763 = vunpack.c.l.b16 %v727
    %v764 = vunpack.c.l.b16 %v728
    %v765 = vpack.c.b16 %v750, %v749
    %v766 = vpack.c.b16 %v752, %v751
    %v767 = vpack.c.b16 %v754, %v753
    %v768 = vpack.c.b16 %v756, %v755
    %v769 = vpack.c.b16 %v758, %v757
    %v770 = vpack.c.b16 %v760, %v759
    %v771 = vpack.c.b16 %v762, %v761
    %v772 = vpack.c.b16 %v764, %v763
    %781 = vmatpush.bf16.msra.mxu0 %v772
    %782 = vmatpush.bf16.msra.mxu0 %v771
    %783 = vmatpush.bf16.msra.mxu0 %v770
    %784 = vmatpush.bf16.msra.mxu0 %v769
    %785 = vmatpush.bf16.msra.mxu0 %v768
    %786 = vmatpush.bf16.msra.mxu0 %v767
    %787 = vmatpush.bf16.msra.mxu0 %v766
    %788 = vmatpush.bf16.msra.mxu0 %v765
    %789 = vmatmul.bf16.gmra.mxu0 %v712
    %v790 = vpop.f32.mrf.mxu0
    %v791 = vadd.f32 %v731, %v790
    %v792 = vpop.f32.mrf.mxu0
    %793 = vdwg.mxu0
    %v794 = vmax.f32 %v791, 0.0
    %v795 = vpack.c.bf16 %v794, %v794
    %v796 = vld [vmem:[#allocation16] sm:$0xff]
    %v797 = vld [vmem:[#allocation16 + $0x8] sm:$0xff]
    %v798 = vld [vmem:[#allocation16 + $0x10] sm:$0xff]
    %v799 = vld [vmem:[#allocation16 + $0x18] sm:$0xff]
    %v800 = vld [vmem:[#allocation16 + $0x20] sm:$0xff]
    %v801 = vld [vmem:[#allocation16 + $0x28] sm:$0xff]
    %v802 = vld [vmem:[#allocation16 + $0x30] sm:$0xff]
    %v803 = vld [vmem:[#allocation16 + $0x38] sm:$0xff]
    %v804 = vld [vmem:[#allocation16 + $0x40] sm:$0xff]
    %v805 = vld [vmem:[#allocation16 + $0x48] sm:$0xff]
    %v806 = vld [vmem:[#allocation16 + $0x50] sm:$0xff]
    %v807 = vld [vmem:[#allocation16 + $0x58] sm:$0xff]
    %v808 = vld [vmem:[#allocation16 + $0x60] sm:$0xff]
    %v809 = vld [vmem:[#allocation16 + $0x68] sm:$0xff]
    %v810 = vld [vmem:[#allocation16 + $0x70] sm:$0xff]
    %v811 = vld [vmem:[#allocation16 + $0x78] sm:$0xff]
    %v812 = vld [vmem:[%s11] sm:$0x3]
    %v814 = vperm.slane %v812, 0
    %v815 = vperm.slane %v812, 1
    %v834 = vunpack.c.l.b16 %v796
    %v835 = vunpack.c.h.b16 %v796
    %v836 = vunpack.c.l.b16 %v797
    %v837 = vunpack.c.h.b16 %v797
    %v838 = vunpack.c.l.b16 %v798
    %v839 = vunpack.c.h.b16 %v798
    %v840 = vunpack.c.l.b16 %v799
    %v841 = vunpack.c.h.b16 %v799
    %v842 = vunpack.c.l.b16 %v800
    %v843 = vunpack.c.h.b16 %v800
    %v844 = vunpack.c.l.b16 %v801
    %v845 = vunpack.c.h.b16 %v801
    %v846 = vunpack.c.l.b16 %v802
    %v847 = vunpack.c.h.b16 %v802
    %v848 = vunpack.c.l.b16 %v803
    %v849 = vunpack.c.h.b16 %v803
    %v850 = vunpack.c.l.b16 %v804
    %v851 = vunpack.c.h.b16 %v804
    %v852 = vunpack.c.l.b16 %v805
    %v853 = vunpack.c.h.b16 %v805
    %v854 = vunpack.c.l.b16 %v806
    %v855 = vunpack.c.h.b16 %v806
    %v856 = vunpack.c.l.b16 %v807
    %v857 = vunpack.c.h.b16 %v807
    %v858 = vunpack.c.l.b16 %v808
    %v859 = vunpack.c.h.b16 %v808
    %v860 = vunpack.c.l.b16 %v809
    %v861 = vunpack.c.h.b16 %v809
    %v862 = vunpack.c.l.b16 %v810
    %v863 = vunpack.c.h.b16 %v810
    %v864 = vunpack.c.l.b16 %v811
    %v865 = vunpack.c.h.b16 %v811
    %v866 = vpack.c.b16 %v836, %v834
    %v867 = vpack.c.b16 %v837, %v835
    %v868 = vpack.c.b16 %v840, %v838
    %v869 = vpack.c.b16 %v841, %v839
    %v870 = vpack.c.b16 %v844, %v842
    %v871 = vpack.c.b16 %v845, %v843
    %v872 = vpack.c.b16 %v848, %v846
    %v873 = vpack.c.b16 %v849, %v847
    %v874 = vpack.c.b16 %v852, %v850
    %v875 = vpack.c.b16 %v853, %v851
    %v876 = vpack.c.b16 %v856, %v854
    %v877 = vpack.c.b16 %v857, %v855
    %v878 = vpack.c.b16 %v860, %v858
    %v879 = vpack.c.b16 %v861, %v859
    %v880 = vpack.c.b16 %v864, %v862
    %v881 = vpack.c.b16 %v865, %v863
    %898 = vmatpush.bf16.msra.mxu0 %v880
    %899 = vmatpush.bf16.msra.mxu0 %v878
    %900 = vmatpush.bf16.msra.mxu0 %v876
    %901 = vmatpush.bf16.msra.mxu0 %v874
    %902 = vmatpush.bf16.msra.mxu0 %v872
    %903 = vmatpush.bf16.msra.mxu0 %v870
    %904 = vmatpush.bf16.msra.mxu0 %v868
    %905 = vmatpush.bf16.msra.mxu0 %v866
    %906 = vmatmul.bf16.gmra.mxu0 %v795
    %v907 = vpop.f32.mrf.mxu0
    %v908 = vadd.f32 %v814, %v907
    %v909 = vpop.f32.mrf.mxu0
    %910 = vdwg.mxu0
    %911 = vmatpush.bf16.msra.mxu0 %v881
    %912 = vmatpush.bf16.msra.mxu0 %v879
    %913 = vmatpush.bf16.msra.mxu0 %v877
    %914 = vmatpush.bf16.msra.mxu0 %v875
    %915 = vmatpush.bf16.msra.mxu0 %v873
    %916 = vmatpush.bf16.msra.mxu0 %v871
    %917 = vmatpush.bf16.msra.mxu0 %v869
    %918 = vmatpush.bf16.msra.mxu0 %v867
    %919 = vmatmul.bf16.gmra.mxu0 %v795
    %v920 = vpop.f32.mrf.mxu0
    %v921 = vadd.f32 %v815, %v920
    %v922 = vpop.f32.mrf.mxu0
    %923 = vdwg.mxu0
    %v924 = vmax.f32 %v908, 0.0
    %v925 = vmax.f32 %v921, 0.0
    %v926 = vpack.c.bf16 %v924, %v924
    %v927 = vpack.c.bf16 %v925, %v925
    %v928 = vld [vmem:[#allocation17] sm:$0xff]
    %v929 = vld [vmem:[#allocation17 + $0x8] sm:$0xff]
    %v930 = vld [vmem:[#allocation17 + $0x10] sm:$0xff]
    %v931 = vld [vmem:[#allocation17 + $0x18] sm:$0xff]
    %v932 = vld [vmem:[#allocation17 + $0x20] sm:$0xff]
    %v933 = vld [vmem:[#allocation17 + $0x28] sm:$0xff]
    %v934 = vld [vmem:[#allocation17 + $0x30] sm:$0xff]
    %v935 = vld [vmem:[#allocation17 + $0x38] sm:$0xff]
    %v936 = vld [vmem:[#allocation17 + $0x40] sm:$0xff]
    %v937 = vld [vmem:[#allocation17 + $0x48] sm:$0xff]
    %v938 = vld [vmem:[#allocation17 + $0x50] sm:$0xff]
    %v939 = vld [vmem:[#allocation17 + $0x58] sm:$0xff]
    %v940 = vld [vmem:[#allocation17 + $0x60] sm:$0xff]
    %v941 = vld [vmem:[#allocation17 + $0x68] sm:$0xff]
    %v942 = vld [vmem:[#allocation17 + $0x70] sm:$0xff]
    %v943 = vld [vmem:[#allocation17 + $0x78] sm:$0xff]
    %v944 = vld [vmem:[#allocation17 + $0x80] sm:$0xff]
    %v945 = vld [vmem:[#allocation17 + $0x88] sm:$0xff]
    %v946 = vld [vmem:[#allocation17 + $0x90] sm:$0xff]
    %v947 = vld [vmem:[#allocation17 + $0x98] sm:$0xff]
    %v948 = vld [vmem:[#allocation17 + $0xa0] sm:$0xff]
    %v949 = vld [vmem:[#allocation17 + $0xa8] sm:$0xff]
    %v950 = vld [vmem:[#allocation17 + $0xb0] sm:$0xff]
    %v951 = vld [vmem:[#allocation17 + $0xb8] sm:$0xff]
    %v952 = vld [vmem:[#allocation17 + $0xc0] sm:$0xff]
    %v953 = vld [vmem:[#allocation17 + $0xc8] sm:$0xff]
    %v954 = vld [vmem:[#allocation17 + $0xd0] sm:$0xff]
    %v955 = vld [vmem:[#allocation17 + $0xd8] sm:$0xff]
    %v956 = vld [vmem:[#allocation17 + $0xe0] sm:$0xff]
    %v957 = vld [vmem:[#allocation17 + $0xe8] sm:$0xff]
    %v958 = vld [vmem:[#allocation17 + $0xf0] sm:$0xff]
    %v959 = vld [vmem:[#allocation17 + $0xf8] sm:$0xff]
    %v960 = vld [vmem:[%s13] sm:$0x3]
    %v962 = vperm.slane %v960, 0
    %v963 = vperm.slane %v960, 1
    %v998 = vunpack.c.l.b16 %v928
    %v999 = vunpack.c.h.b16 %v928
    %v1000 = vunpack.c.l.b16 %v929
    %v1001 = vunpack.c.h.b16 %v929
    %v1002 = vunpack.c.l.b16 %v930
    %v1003 = vunpack.c.h.b16 %v930
    %v1004 = vunpack.c.l.b16 %v931
    %v1005 = vunpack.c.h.b16 %v931
    %v1006 = vunpack.c.l.b16 %v932
    %v1007 = vunpack.c.h.b16 %v932
    %v1008 = vunpack.c.l.b16 %v933
    %v1009 = vunpack.c.h.b16 %v933
    %v1010 = vunpack.c.l.b16 %v934
    %v1011 = vunpack.c.h.b16 %v934
    %v1012 = vunpack.c.l.b16 %v935
    %v1013 = vunpack.c.h.b16 %v935
    %v1014 = vunpack.c.l.b16 %v936
    %v1015 = vunpack.c.h.b16 %v936
    %v1016 = vunpack.c.l.b16 %v937
    %v1017 = vunpack.c.h.b16 %v937
    %v1018 = vunpack.c.l.b16 %v938
    %v1019 = vunpack.c.h.b16 %v938
    %v1020 = vunpack.c.l.b16 %v939
    %v1021 = vunpack.c.h.b16 %v939
    %v1022 = vunpack.c.l.b16 %v940
    %v1023 = vunpack.c.h.b16 %v940
    %v1024 = vunpack.c.l.b16 %v941
    %v1025 = vunpack.c.h.b16 %v941
    %v1026 = vunpack.c.l.b16 %v942
    %v1027 = vunpack.c.h.b16 %v942
    %v1028 = vunpack.c.l.b16 %v943
    %v1029 = vunpack.c.h.b16 %v943
    %v1030 = vunpack.c.l.b16 %v944
    %v1031 = vunpack.c.h.b16 %v944
    %v1032 = vunpack.c.l.b16 %v945
    %v1033 = vunpack.c.h.b16 %v945
    %v1034 = vunpack.c.l.b16 %v946
    %v1035 = vunpack.c.h.b16 %v946
    %v1036 = vunpack.c.l.b16 %v947
    %v1037 = vunpack.c.h.b16 %v947
    %v1038 = vunpack.c.l.b16 %v948
    %v1039 = vunpack.c.h.b16 %v948
    %v1040 = vunpack.c.l.b16 %v949
    %v1041 = vunpack.c.h.b16 %v949
    %v1042 = vunpack.c.l.b16 %v950
    %v1043 = vunpack.c.h.b16 %v950
    %v1044 = vunpack.c.l.b16 %v951
    %v1045 = vunpack.c.h.b16 %v951
    %v1046 = vunpack.c.l.b16 %v952
    %v1047 = vunpack.c.h.b16 %v952
    %v1048 = vunpack.c.l.b16 %v953
    %v1049 = vunpack.c.h.b16 %v953
    %v1050 = vunpack.c.l.b16 %v954
    %v1051 = vunpack.c.h.b16 %v954
    %v1052 = vunpack.c.l.b16 %v955
    %v1053 = vunpack.c.h.b16 %v955
    %v1054 = vunpack.c.l.b16 %v956
    %v1055 = vunpack.c.h.b16 %v956
    %v1056 = vunpack.c.l.b16 %v957
    %v1057 = vunpack.c.h.b16 %v957
    %v1058 = vunpack.c.l.b16 %v958
    %v1059 = vunpack.c.h.b16 %v958
    %v1060 = vunpack.c.l.b16 %v959
    %v1061 = vunpack.c.h.b16 %v959
    %v1062 = vpack.c.b16 %v1000, %v998
    %v1063 = vpack.c.b16 %v1001, %v999
    %v1064 = vpack.c.b16 %v1004, %v1002
    %v1065 = vpack.c.b16 %v1005, %v1003
    %v1066 = vpack.c.b16 %v1008, %v1006
    %v1067 = vpack.c.b16 %v1009, %v1007
    %v1068 = vpack.c.b16 %v1012, %v1010
    %v1069 = vpack.c.b16 %v1013, %v1011
    %v1070 = vpack.c.b16 %v1016, %v1014
    %v1071 = vpack.c.b16 %v1017, %v1015
    %v1072 = vpack.c.b16 %v1020, %v1018
    %v1073 = vpack.c.b16 %v1021, %v1019
    %v1074 = vpack.c.b16 %v1024, %v1022
    %v1075 = vpack.c.b16 %v1025, %v1023
    %v1076 = vpack.c.b16 %v1028, %v1026
    %v1077 = vpack.c.b16 %v1029, %v1027
    %v1078 = vpack.c.b16 %v1032, %v1030
    %v1079 = vpack.c.b16 %v1033, %v1031
    %v1080 = vpack.c.b16 %v1036, %v1034
    %v1081 = vpack.c.b16 %v1037, %v1035
    %v1082 = vpack.c.b16 %v1040, %v1038
    %v1083 = vpack.c.b16 %v1041, %v1039
    %v1084 = vpack.c.b16 %v1044, %v1042
    %v1085 = vpack.c.b16 %v1045, %v1043
    %v1086 = vpack.c.b16 %v1048, %v1046
    %v1087 = vpack.c.b16 %v1049, %v1047
    %v1088 = vpack.c.b16 %v1052, %v1050
    %v1089 = vpack.c.b16 %v1053, %v1051
    %v1090 = vpack.c.b16 %v1056, %v1054
    %v1091 = vpack.c.b16 %v1057, %v1055
    %v1092 = vpack.c.b16 %v1060, %v1058
    %v1093 = vpack.c.b16 %v1061, %v1059
    %1126 = vmatpush.bf16.msra.mxu0 %v1076
    %1127 = vmatpush.bf16.msra.mxu0 %v1074
    %1128 = vmatpush.bf16.msra.mxu0 %v1072
    %1129 = vmatpush.bf16.msra.mxu0 %v1070
    %1130 = vmatpush.bf16.msra.mxu0 %v1068
    %1131 = vmatpush.bf16.msra.mxu0 %v1066
    %1132 = vmatpush.bf16.msra.mxu0 %v1064
    %1133 = vmatpush.bf16.msra.mxu0 %v1062
    %1134 = vmatmul.bf16.gmra.mxu0 %v926
    %v1135 = vpop.f32.mrf.mxu0
    %v1136 = vadd.f32 %v962, %v1135
    %v1137 = vpop.f32.mrf.mxu0
    %1138 = vdwg.mxu0
    %1139 = vmatpush.bf16.msra.mxu0 %v1092
    %1140 = vmatpush.bf16.msra.mxu0 %v1090
    %1141 = vmatpush.bf16.msra.mxu0 %v1088
    %1142 = vmatpush.bf16.msra.mxu0 %v1086
    %1143 = vmatpush.bf16.msra.mxu0 %v1084
    %1144 = vmatpush.bf16.msra.mxu0 %v1082
    %1145 = vmatpush.bf16.msra.mxu0 %v1080
    %1146 = vmatpush.bf16.msra.mxu0 %v1078
    %1147 = vmatmul.bf16.gmra.mxu0 %v927
    %v1148 = vpop.f32.mrf.mxu0
    %v1149 = vadd.f32 %v1136, %v1148
    %v1150 = vpop.f32.mrf.mxu0
    %1151 = vdwg.mxu0
    %1152 = vmatpush.bf16.msra.mxu0 %v1077
    %1153 = vmatpush.bf16.msra.mxu0 %v1075
    %1154 = vmatpush.bf16.msra.mxu0 %v1073
    %1155 = vmatpush.bf16.msra.mxu0 %v1071
    %1156 = vmatpush.bf16.msra.mxu0 %v1069
    %1157 = vmatpush.bf16.msra.mxu0 %v1067
    %1158 = vmatpush.bf16.msra.mxu0 %v1065
    %1159 = vmatpush.bf16.msra.mxu0 %v1063
    %1160 = vmatmul.bf16.gmra.mxu0 %v926
    %v1161 = vpop.f32.mrf.mxu0
    %v1162 = vadd.f32 %v963, %v1161
    %v1163 = vpop.f32.mrf.mxu0
    %1164 = vdwg.mxu0
    %1165 = vmatpush.bf16.msra.mxu0 %v1093
    %1166 = vmatpush.bf16.msra.mxu0 %v1091
    %1167 = vmatpush.bf16.msra.mxu0 %v1089
    %1168 = vmatpush.bf16.msra.mxu0 %v1087
    %1169 = vmatpush.bf16.msra.mxu0 %v1085
    %1170 = vmatpush.bf16.msra.mxu0 %v1083
    %1171 = vmatpush.bf16.msra.mxu0 %v1081
    %1172 = vmatpush.bf16.msra.mxu0 %v1079
    %1173 = vmatmul.bf16.gmra.mxu0 %v927
    %v1174 = vpop.f32.mrf.mxu0
    %v1175 = vadd.f32 %v1162, %v1174
    %v1176 = vpop.f32.mrf.mxu0
    %1177 = vdwg.mxu0
    %v1178 = vxor.u32 %v1149, 2147483648
    %v1179 = vxor.u32 %v1175, 2147483648
    %v1180 = vmul.f32 %v1178, 1.442695
    %v1181 = vpow.pop %v1180
    %v1182 = vmul.f32 %v1179, 1.442695
    %v1183 = vpow.pop %v1182
    %v1184 = vadd.f32 %v1181, 1.0
    %v1185 = vadd.f32 %v1183, 1.0
    %v1186 = vrcp.pop %v1184
    %v1187 = vmul.f32 %v1184, %v1186
    %v1188 = vsub.f32 1.0, %v1187
    %v1189 = vmul.f32 %v1186, %v1188
    %v1190 = vadd.f32 %v1186, %v1189
    %vm1191 = vweird.f32 %v1184
    %vm1192 = vweird.f32 %v1186
    %vm1193 = vmor %vm1191, %vm1192
    %v1194 = vsel %vm1193, %v1186, %v1190
    %v1195 = vand.u32 2147483647, %v1184
    %vm1196 = vcmp.eq.f32.partialorder %v1195, 8.507059e+37
    %v1197 = vand.u32 %v1184, 2147483648
    %v1198 = vor.u32 1.1754944e-38, %v1197
    %v1199 = vsel %vm1196, %v1198, %v1194
    %v1200 = vmul.f32 1.0, %v1199
    %v1201 = vrcp.pop %v1185
    %v1202 = vmul.f32 %v1185, %v1201
    %v1203 = vsub.f32 1.0, %v1202
    %v1204 = vmul.f32 %v1201, %v1203
    %v1205 = vadd.f32 %v1201, %v1204
    %vm1206 = vweird.f32 %v1185
    %vm1207 = vweird.f32 %v1201
    %vm1208 = vmor %vm1206, %vm1207
    %v1209 = vsel %vm1208, %v1201, %v1205
    %v1210 = vand.u32 2147483647, %v1185
    %vm1211 = vcmp.eq.f32.partialorder %v1210, 8.507059e+37
    %v1212 = vand.u32 %v1185, 2147483648
    %v1213 = vor.u32 1.1754944e-38, %v1212
    %v1214 = vsel %vm1211, %v1213, %v1209
    %v1215 = vmul.f32 1.0, %v1214
    %1216 = vst [vmem:[#allocation19] sm:$0xff] %v1200
    %1217 = vst [vmem:[#allocation19 + $0x8] sm:$0xff] %v1215
    // Predicated region
    $region98: #{tpu_custom_call.1} parent=1 // pred_check
      _
    $region99: #{tpu_custom_call.1} parent=1 // pred_check_branch
      %1219 = sbr.rel (0) target = $region101
    $region100: #{tpu_custom_call.1} parent=1 // pred_region
      %1221 = vsyncadd [#allocation4], 0
      %s1223 = sshll.u32 [#allocation19], 4
      %s1224 = int_to_ptr.vmem [resolvable:$true] %s1223
      %s1225 = sshll.u32 %s14, 4
      %s1226 = int_to_ptr.hbm [resolvable:$true] %s1225
      %1228 = dma.vmem_to_hbm [thread:$0]  %s1224, 256, %s1226, [#allocation4]
    $region101: #{tpu_custom_call.1} parent=1 // pred_fallthru
      _
    // Predicated region
    $region102: #{tpu_custom_call.1} parent=1 // pred_check
      _
    $region103: #{tpu_custom_call.1} parent=1 // pred_check_branch
      %1230 = sbr.rel (0) target = $region105
    $region104: #{tpu_custom_call.1} parent=1 // pred_region
      %1232 = vsyncadd [#allocation21], 0
      %s1234 = sshll.u32 [#allocation20], 4
      %s1235 = int_to_ptr.vmem [resolvable:$true] %s1234
      %s1236 = sshll.u32 %s15, 4
      %s1237 = int_to_ptr.hbm [resolvable:$true] %s1236
      %1239 = dma.vmem_to_hbm [thread:$0]  %s1235, 128, %s1237, [#allocation21]
    $region105: #{tpu_custom_call.1} parent=1 // pred_fallthru
      _
    // Predicated region
    $region106: #{tpu_custom_call.1} parent=1 // pred_check
      _
    $region107: #{tpu_custom_call.1} parent=1 // pred_check_branch
      %1241 = sbr.rel (0) target = $region109
    $region108: #{tpu_custom_call.1} parent=1 // pred_region
      %1243 = dma.done [#allocation4], 256
    $region109: #{tpu_custom_call.1} parent=1 // pred_fallthru
      _
    // Predicated region
    $region110: #{tpu_custom_call.1} parent=1 // pred_check
      _
    $region111: #{tpu_custom_call.1} parent=1 // pred_check_branch
      %1245 = sbr.rel (0) target = $region113
    $region112: #{tpu_custom_call.1} parent=1 // pred_region
      %1247 = dma.done [#allocation21], 128
    $region113: #{tpu_custom_call.1} parent=1 // pred_fallthru
      _
    %1248 = vsyncpa [#allocation3], 1
    %1249 = vsyncpa [#allocation6], 1
    %1250 = vsyncpa [#allocation9], 1
    %1251 = vsyncpa [#allocation12], 1
    %1252 = vsyncpa [#allocation15], 1
    %1253 = vsyncpa [#allocation18], 1
    %1254 = vsyncpa [#allocation4], 1
    %1255 = vsyncpa [#allocation21], 1

</llo_original>
